<compile_context>
chip_gen: v7x
topology: tpu7x:2x2x1
jax: 0.10.0
libtpu: 0.0.40
codegen_flags: <defaults>
</compile_context>

<pallas_src>
import math
import functools

import numpy as np
import jax
import jax.numpy as jnp
from jax import lax
from jax.experimental import pallas as pl
from jax.experimental.pallas import tpu as pltpu


# ----------------------------------------------------------------------------
# helpers
# ----------------------------------------------------------------------------
def _pick_tile(dim, pref, align):
    """Largest tile <= pref that divides `dim` and is a multiple of `align`;
    falls back to the full dimension (always legal for BlockSpec)."""
    if dim <= pref:
        return dim
    t = (pref // align) * align
    while t >= align:
        if dim % t == 0:
            return t
        t -= align
    return dim


def _vmem_limit_bytes(est_bytes):
    # Explicit scoped-VMEM limit: generous vs. the 16/32 MiB defaults, capped at
    # v7x's 64 MiB physical VMEM so the same kernel compiles on every generation.
    return int(min(64 * 1024 * 1024, max(32 * 1024 * 1024, 2 * est_bytes)))


# ----------------------------------------------------------------------------
# Kernel 1: tiled dense layer   y = [LN](x) @ W + b  [+ relu] [+ residual]
#           W is pre-transposed to (K, N) and stored bf16 (halves weight traffic).
# ----------------------------------------------------------------------------
def _linear_kernel(*refs, activation, has_residual, has_ln, has_acc, eps):
    it = iter(refs)
    x_ref = next(it)
    g_ref = next(it) if has_ln else None
    bln_ref = next(it) if has_ln else None
    w_ref = next(it)
    b_ref = next(it)
    r_ref = next(it) if has_residual else None
    o_ref = next(it)
    # f32 output: accumulate directly into the resident output block (saves VMEM);
    # bf16 output: use the f32 scratch accumulator.
    acc_ref = next(it) if has_acc else o_ref

    @pl.when(pl.program_id(2) == 0)
    def _():
        acc_ref[...] = jnp.zeros_like(acc_ref)

    if has_ln:
        # torch-style LayerNorm (unbiased std, (std + eps) denominator) fused into
        # the matmul prologue. Requires a full-K block (enforced by the wrapper).
        xf = x_ref[...].astype(jnp.float32)
        d = xf.shape[-1]
        mean = jnp.mean(xf, axis=-1, keepdims=True)
        xc = xf - mean
        var = jnp.sum(xc * xc, axis=-1, keepdims=True) * (1.0 / (d - 1))
        xf = xc * pl.reciprocal(jnp.sqrt(var) + eps, approx=False)
        xf = xf * g_ref[...] + bln_ref[...]
        x_op = xf.astype(jnp.bfloat16)
    else:
        x_op = x_ref[...].astype(jnp.bfloat16)

    # bf16 MXU operands, f32 accumulation.
    acc_ref[...] += jnp.dot(x_op, w_ref[...].astype(jnp.bfloat16),
                            preferred_element_type=jnp.float32).astype(acc_ref.dtype)

    @pl.when(pl.program_id(2) == pl.num_programs(2) - 1)
    def _():
        y = acc_ref[...].astype(jnp.float32) + b_ref[...].astype(jnp.float32)
        if activation == "relu":
            y = jnp.maximum(y, 0.0)
        if has_residual:
            y = y + r_ref[...].astype(jnp.float32)
        o_ref[...] = y.astype(o_ref.dtype)


def linear(x, w, b, residual=None, activation=None, ln=None, out_dtype=None):
    """x: (M, K), w: (K, N) bf16/f32 pre-transposed, b: (N,) f32 -> (M, N).

    ln = (gamma, beta, eps) fuses a LayerNorm over the K axis into the prologue
    (forces a single full-K block)."""
    m, kd = x.shape
    kw, n = w.shape
    assert kw == kd
    if out_dtype is None:
        out_dtype = x.dtype
    out_dtype = np.dtype(out_dtype)
    has_acc = out_dtype != np.dtype(jnp.float32)

    tm = _pick_tile(m, 512, 16)                 # 16: bf16 sublane packing
    tn = _pick_tile(n, 512, 128)
    tk = kd if ln is not None else _pick_tile(kd, 1024, 128)
    assert m % tm == 0 and n % tn == 0 and kd % tk == 0
    grid = (m // tm, n // tn, kd // tk)

    in_specs = [pl.BlockSpec((tm, tk), lambda i, j, kk: (i, kk))]
    args = [x]
    eps = 0.0
    if ln is not None:
        gamma, beta, eps = ln
        in_specs += [pl.BlockSpec((1, kd), lambda i, j, kk: (0, 0)),
                     pl.BlockSpec((1, kd), lambda i, j, kk: (0, 0))]
        args += [gamma.reshape(1, kd), beta.reshape(1, kd)]
    in_specs += [pl.BlockSpec((tk, tn), lambda i, j, kk: (kk, j)),
                 pl.BlockSpec((1, tn), lambda i, j, kk: (0, j))]
    args += [w, b.reshape(1, n)]
    if residual is not None:
        in_specs.append(pl.BlockSpec((tm, tn), lambda i, j, kk: (i, j)))
        args.append(residual)

    scratch_shapes = [pltpu.VMEM((tm, tn), jnp.float32)] if has_acc else []

    est = 2 * (tm * tk * x.dtype.itemsize + tk * tn * w.dtype.itemsize
               + tn * 4 + tm * tn * out_dtype.itemsize)
    if residual is not None:
        est += 2 * tm * tn * residual.dtype.itemsize
    if ln is not None:
        est += 4 * kd * 4
    if has_acc:
        est += tm * tn * 4

    bytes_acc = (m * kd * x.dtype.itemsize + kd * n * w.dtype.itemsize
                 + m * n * out_dtype.itemsize + n * 4
                 + (m * n * residual.dtype.itemsize if residual is not None else 0))

    return pl.pallas_call(
        functools.partial(_linear_kernel, activation=activation,
                          has_residual=residual is not None,
                          has_ln=ln is not None, has_acc=has_acc, eps=float(eps)),
        grid=grid,
        in_specs=in_specs,
        out_specs=pl.BlockSpec((tm, tn), lambda i, j, kk: (i, j)),
        out_shape=jax.ShapeDtypeStruct((m, n), out_dtype),
        scratch_shapes=scratch_shapes,
        compiler_params=pltpu.CompilerParams(
            dimension_semantics=("parallel", "parallel", "arbitrary"),
            vmem_limit_bytes=_vmem_limit_bytes(est)),
        cost_estimate=pl.CostEstimate(flops=int(2 * m * n * kd), transcendentals=0,
                                      bytes_accessed=int(bytes_acc)),
    )(*args)


# ----------------------------------------------------------------------------
# Kernel 2: flash-style self-attention on the fused QKV projection
#           grid = (B, S//tq, S//tkv); kv axis is the running-softmax reduction.
# ----------------------------------------------------------------------------
def _attention_kernel(q_slab_ref, kv_slab_ref, mask_ref, o_ref,
                      m_ref, l_ref, acc_ref, *, nb_head, d_k):
    ki = pl.program_id(2)
    d_model = nb_head * d_k
    neg = jnp.float32(-1e9)

    @pl.when(ki == 0)
    def _():
        m_ref[...] = jnp.full_like(m_ref, -jnp.inf)
        l_ref[...] = jnp.zeros_like(l_ref)
        acc_ref[...] = jnp.zeros_like(acc_ref)

    q_slab = q_slab_ref[0]                      # (tq, 3D) query-tile slab
    kv_slab = kv_slab_ref[0]                    # (tkv, 3D) kv-tile slab
    masked = mask_ref[0] == 0                   # int8 compared directly, no f32 cast

    for h in range(nb_head):                    # static unroll over heads
        # 1/sqrt(d_k) is folded into the Q projection weights at init.
        q = q_slab[:, h * d_k:(h + 1) * d_k].astype(jnp.bfloat16)
        k = kv_slab[:, d_model + h * d_k:d_model + (h + 1) * d_k].astype(jnp.bfloat16)
        v = kv_slab[:, 2 * d_model + h * d_k:2 * d_model + (h + 1) * d_k].astype(jnp.bfloat16)

        # Q @ K^T without an explicit transpose (contract last dims); f32 scores.
        s = lax.dot_general(q, k, (((1,), (1,)), ((), ())),
                            preferred_element_type=jnp.float32)        # (tq, tkv)
        s = jnp.where(masked, neg, s)

        m_prev = m_ref[h]                                               # (tq, 1)
        m_new = jnp.maximum(m_prev, jnp.max(s, axis=-1, keepdims=True))
        alpha = jnp.exp(m_prev - m_new)
        p = jnp.exp(s - m_new)
        l_ref[h] = alpha * l_ref[h] + jnp.sum(p, axis=-1, keepdims=True)
        acc_ref[h] = alpha * acc_ref[h] + jnp.dot(p.astype(jnp.bfloat16), v,
                                                  preferred_element_type=jnp.float32)
        m_ref[h] = m_new

    @pl.when(ki == pl.num_programs(2) - 1)
    def _():
        for h in range(nb_head):
            inv = pl.reciprocal(l_ref[h], approx=True)                  # EUP slot
            # per-head direct store (no concat temp -> bounded live ranges)
            o_ref[0, :, h * d_k:(h + 1) * d_k] = (acc_ref[h] * inv).astype(o_ref.dtype)


def attention(qkv, mask_i8, nb_head, d_k):
    """qkv: (B, S, 3*D) fused projection, mask_i8: (B, S, S) int8 -> (B, S, D)."""
    B, S, three_d = qkv.shape
    D = nb_head * d_k
    tq = _pick_tile(S, 256, 16)
    tkv = _pick_tile(S, 512, 128)
    assert S % tq == 0 and S % tkv == 0
    grid = (B, S // tq, S // tkv)

    est = 2 * (tq * three_d * qkv.dtype.itemsize
               + tkv * three_d * qkv.dtype.itemsize
               + tq * tkv
               + tq * D * qkv.dtype.itemsize)
    est += nb_head * (2 * tq * 128 + tq * max(d_k, 128)) * 4     # m/l/acc scratch (padded)
    est += 6 * tq * tkv * 4                                      # s/p temporaries headroom

    flops = 4 * B * nb_head * S * S * d_k + 10 * B * nb_head * S * S
    return pl.pallas_call(
        functools.partial(_attention_kernel, nb_head=nb_head, d_k=d_k),
        grid=grid,
        in_specs=[pl.BlockSpec((1, tq, three_d), lambda b, qi, ki: (b, qi, 0)),
                  pl.BlockSpec((1, tkv, three_d), lambda b, qi, ki: (b, ki, 0)),
                  pl.BlockSpec((1, tq, tkv), lambda b, qi, ki: (b, qi, ki))],
        out_specs=pl.BlockSpec((1, tq, D), lambda b, qi, ki: (b, qi, 0)),
        out_shape=jax.ShapeDtypeStruct((B, S, D), qkv.dtype),
        scratch_shapes=[pltpu.VMEM((nb_head, tq, 1), jnp.float32),
                        pltpu.VMEM((nb_head, tq, 1), jnp.float32),
                        pltpu.VMEM((nb_head, tq, d_k), jnp.float32)],
        compiler_params=pltpu.CompilerParams(
            dimension_semantics=("parallel", "parallel", "arbitrary"),
            vmem_limit_bytes=_vmem_limit_bytes(est)),
        cost_estimate=pl.CostEstimate(
            flops=int(flops),
            transcendentals=int(B * nb_head * S * S),
            bytes_accessed=int(2 * B * S * three_d * qkv.dtype.itemsize
                               + B * S * S + B * S * D * qkv.dtype.itemsize)),
    )(qkv, qkv, mask_i8)


# ----------------------------------------------------------------------------
# Module wrapper: EncoderLayer (pre-LN sublayer connections, eval mode)
# ----------------------------------------------------------------------------
class EncoderLayerPallas:
    def __init__(self, nb_head, model_dimension, feed_forward_dimension, key, eps=1e-6):
        assert model_dimension % nb_head == 0
        self.nb_head = nb_head
        self.d_k = model_dimension // nb_head
        self.d_model = model_dimension
        self.d_ff = feed_forward_dimension
        self.eps = eps

        D, F = model_dimension, feed_forward_dimension
        ks = jax.random.split(key, 12)
        bd = 1.0 / math.sqrt(D)
        bf = 1.0 / math.sqrt(F)
        u = lambda k, shape, bound: jax.random.uniform(k, shape, jnp.float32, -bound, bound)

        # Raw f32 parameters (used by the pure-JAX reference; (in, out) layout).
        self.w_q, self.w_k, self.w_v = u(ks[0], (D, D), bd), u(ks[1], (D, D), bd), u(ks[2], (D, D), bd)
        self.b_q, self.b_k, self.b_v = u(ks[3], (D,), bd), u(ks[4], (D,), bd), u(ks[5], (D,), bd)
        self.w_o, self.b_o = u(ks[6], (D, D), bd), u(ks[7], (D,), bd)
        self.w_1, self.b_1 = u(ks[8], (D, F), bd), u(ks[9], (F,), bd)
        self.w_2, self.b_2 = u(ks[10], (F, D), bf), u(ks[11], (D,), bf)
        # LayerNorms (torch init: a_2 = ones, b_2 = zeros).
        self.ln1_g = jnp.ones((D,), jnp.float32)
        self.ln1_b = jnp.zeros((D,), jnp.float32)
        self.ln2_g = jnp.ones((D,), jnp.float32)
        self.ln2_b = jnp.zeros((D,), jnp.float32)

        # Kernel-side fused weights: Q/K/V concatenated, 1/sqrt(d_k) folded into the
        # Q projection, stored bf16 (MXU operands; half the HBM/VMEM weight traffic).
        scale = 1.0 / math.sqrt(self.d_k)
        self.w_qkv_k = jnp.concatenate([self.w_q * scale, self.w_k, self.w_v],
                                       axis=1).astype(jnp.bfloat16)      # (D, 3D)
        self.b_qkv_k = jnp.concatenate([self.b_q * scale, self.b_k, self.b_v])  # f32 (3D,)
        self.w_o_k = self.w_o.astype(jnp.bfloat16)
        self.w_1_k = self.w_1.astype(jnp.bfloat16)
        self.w_2_k = self.w_2.astype(jnp.bfloat16)

    def __call__(self, x, mask=None):
        B, S, D = x.shape
        x2 = x.reshape(B * S, D)
        if mask is None:
            mask_i8 = jnp.ones((B, S, S), jnp.int8)
        else:
            mask_i8 = jnp.broadcast_to(mask, (B, S, S)).astype(jnp.int8)

        # ---- sublayer 1: x + SelfAttention(LN1(x))   (dropout omitted: eval) ----
        # LN1 fused into the QKV matmul prologue; qkv kept bf16 (matmul operand only).
        qkv = linear(x2, self.w_qkv_k, self.b_qkv_k,
                     ln=(self.ln1_g, self.ln1_b, self.eps), out_dtype=jnp.bfloat16)
        attn = attention(qkv.reshape(B, S, 3 * D), mask_i8, self.nb_head, self.d_k)
        x2 = linear(attn.reshape(B * S, D), self.w_o_k, self.b_o, residual=x2)

        # ---- sublayer 2: x + FFN(LN2(x)) ----
        # LN2 fused into the w_1 matmul prologue; FFN hidden kept bf16.
        f = linear(x2, self.w_1_k, self.b_1, activation="relu",
                   ln=(self.ln2_g, self.ln2_b, self.eps), out_dtype=jnp.bfloat16)
        x2 = linear(f, self.w_2_k, self.b_2, residual=x2)
        return x2.reshape(B, S, D)


# ----------------------------------------------------------------------------
# Pure-JAX reference (torch semantics, eval mode, f32 weights) for a sanity check
# ----------------------------------------------------------------------------
def reference(layer, x, mask):
    B, S, D = x.shape
    H, d_k = layer.nb_head, layer.d_k
    eps = layer.eps

    def ln(v, g, b):
        mean = jnp.mean(v, axis=-1, keepdims=True)
        var = jnp.sum((v - mean) ** 2, axis=-1, keepdims=True) / (v.shape[-1] - 1)
        return g * (v - mean) / (jnp.sqrt(var) + eps) + b

    x2 = x.reshape(B * S, D)

    # sublayer 1
    h = ln(x2, layer.ln1_g, layer.ln1_b)
    q = h @ layer.w_q + layer.b_q
    k = h @ layer.w_k + layer.b_k
    v = h @ layer.w_v + layer.b_v
    split = lambda t: t.reshape(B, S, H, d_k).transpose(0, 2, 1, 3)
    q, k, v = split(q), split(k), split(v)
    s = jnp.einsum("bhqd,bhkd->bhqk", q, k) / math.sqrt(d_k)
    s = jnp.where(mask[:, None, :, :] == 0, -1e9, s)
    p = jax.nn.softmax(s, axis=-1)
    attn = jnp.einsum("bhqk,bhkd->bhqd", p, v)
    attn = attn.transpose(0, 2, 1, 3).reshape(B * S, D)
    x2 = x2 + (attn @ layer.w_o + layer.b_o)

    # sublayer 2
    h = ln(x2, layer.ln2_g, layer.ln2_b)
    f = jnp.maximum(h @ layer.w_1 + layer.b_1, 0.0)
    x2 = x2 + (f @ layer.w_2 + layer.b_2)
    return x2.reshape(B, S, D)


if __name__ == "__main__":
    B, S, D, H, FF = 2, 8, 32, 4, 128   # batch=2, seq=8, hidden=32, heads=4 (d_k=8), ffn=128

    root = jax.random.PRNGKey(0)
    k_param, k_x = jax.random.split(root)

    layer = EncoderLayerPallas(H, D, FF, k_param)

    x = jax.random.normal(k_x, (B, S, D), jnp.float32)
    # causal mask (B, S, S), broadcast over heads like mask.unsqueeze(1)
    mask = jnp.broadcast_to(jnp.tril(jnp.ones((S, S), jnp.int32)), (B, S, S))

    out = jax.block_until_ready(layer(x, mask))
    ref = reference(layer, x, mask)

    assert out.shape == (B, S, D)
    # bf16 MXU operands / bf16 intermediates vs. a pure-f32 reference -> ~1e-2 tolerance.
    assert jnp.allclose(out, ref, atol=2e-2, rtol=2e-2), "mismatch vs reference"

    print("KERNEL_OK")
</pallas_src>

<mosaic_0001>
module attributes {stable_mosaic.version = 11 : i64} {
  func.func @_linear_kernel(%arg0: i32, %arg1: i32, %arg2: i32, %arg3: memref<16x32xf32, #tpu.memory_space<vmem>>, %arg4: memref<1x32xf32, #tpu.memory_space<vmem>>, %arg5: memref<1x32xf32, #tpu.memory_space<vmem>>, %arg6: memref<32x96xbf16, #tpu.memory_space<vmem>>, %arg7: memref<1x96xf32, #tpu.memory_space<vmem>>, %arg8: memref<16x96xbf16, #tpu.memory_space<vmem>>, %arg9: memref<16x96xf32, #tpu.memory_space<vmem>>) attributes {dimension_semantics = [#tpu.dimension_semantics<parallel>, #tpu.dimension_semantics<parallel>, #tpu.dimension_semantics<arbitrary>], iteration_bounds = array<i64: 1, 1, 1>, scalar_prefetch = 0 : i64, scratch_operands = 1 : i64, tpu.core_type = #tpu.core_type<tc>, window_params = [{transform_indices = @transform_0, window_bounds = array<i64: 16, 32>}, {pipeline_mode = #tpu.pipeline_mode<synchronous>, transform_indices = @transform_1, window_bounds = array<i64: 1, 32>}, {pipeline_mode = #tpu.pipeline_mode<synchronous>, transform_indices = @transform_2, window_bounds = array<i64: 1, 32>}, {transform_indices = @transform_3, window_bounds = array<i64: 32, 96>}, {transform_indices = @transform_4, window_bounds = array<i64: 1, 96>}, {transform_indices = @transform_5, window_bounds = array<i64: 16, 96>}]} {
    %c0_i32 = arith.constant 0 : i32
    %0 = arith.cmpi eq, %arg2, %c0_i32 : i32
    %1 = arith.extui %0 : i1 to i32
    %c0_i32_0 = arith.constant 0 : i32
    %2 = arith.cmpi ne, %1, %c0_i32_0 : i32
    scf.if %2 {
      %cst_19 = arith.constant 0.000000e+00 : f32
      %36 = vector.broadcast %cst_19 : f32 to vector<16x96xf32>
      %c0_20 = arith.constant 0 : index
      %c0_21 = arith.constant 0 : index
      %37 = vector.load %arg9[%c0_20, %c0_21] : memref<16x96xf32, #tpu.memory_space<vmem>>, vector<16x96xf32>
      tpu.vector_store %arg9[%c0_20, %c0_21], %36 {strides = array<i32>} : memref<16x96xf32, #tpu.memory_space<vmem>>, vector<16x96xf32>,
    } else {
    }
    %c0 = arith.constant 0 : index
    %c0_1 = arith.constant 0 : index
    %3 = vector.load %arg3[%c0, %c0_1] : memref<16x32xf32, #tpu.memory_space<vmem>>, vector<16x32xf32>
    %cst = arith.constant dense<0.000000e+00> : vector<16xf32>
    %4 = vector.multi_reduction <add>, %3, %cst [1] : vector<16x32xf32> to vector<16xf32>
    %5 = vector.shape_cast %4 : vector<16xf32> to vector<16x1xf32>
    %cst_2 = arith.constant 3.200000e+01 : f32
    %6 = vector.broadcast %cst_2 : f32 to vector<16x1xf32>
    %7 = arith.divf %5, %6 : vector<16x1xf32>
    %8 = vector.broadcast %7 : vector<16x1xf32> to vector<16x32xf32>
    %9 = arith.subf %3, %8 : vector<16x32xf32>
    %10 = arith.mulf %9, %9 : vector<16x32xf32>
    %cst_3 = arith.constant dense<0.000000e+00> : vector<16xf32>
    %11 = vector.multi_reduction <add>, %10, %cst_3 [1] : vector<16x32xf32> to vector<16xf32>
    %12 = vector.shape_cast %11 : vector<16xf32> to vector<16x1xf32>
    %cst_4 = arith.constant 0.0322580636 : f32
    %13 = vector.broadcast %cst_4 : f32 to vector<16x1xf32>
    %14 = arith.mulf %12, %13 : vector<16x1xf32>
    %15 = math.sqrt %14 : vector<16x1xf32>
    %cst_5 = arith.constant 9.99999997E-7 : f32
    %16 = vector.broadcast %cst_5 : f32 to vector<16x1xf32>
    %17 = arith.addf %15, %16 : vector<16x1xf32>
    %18 = tpu.reciprocal %17 : vector<16x1xf32> -> vector<16x1xf32>
    %19 = vector.broadcast %18 : vector<16x1xf32> to vector<16x32xf32>
    %20 = arith.mulf %9, %19 : vector<16x32xf32>
    %c0_6 = arith.constant 0 : index
    %c0_7 = arith.constant 0 : index
    %21 = vector.load %arg4[%c0_6, %c0_7] : memref<1x32xf32, #tpu.memory_space<vmem>>, vector<1x32xf32>
    %22 = vector.broadcast %21 : vector<1x32xf32> to vector<16x32xf32>
    %23 = arith.mulf %20, %22 : vector<16x32xf32>
    %c0_8 = arith.constant 0 : index
    %c0_9 = arith.constant 0 : index
    %24 = vector.load %arg5[%c0_8, %c0_9] : memref<1x32xf32, #tpu.memory_space<vmem>>, vector<1x32xf32>
    %25 = vector.broadcast %24 : vector<1x32xf32> to vector<16x32xf32>
    %26 = arith.addf %23, %25 : vector<16x32xf32>
    %27 = arith.truncf %26 : vector<16x32xf32> to vector<16x32xbf16>
    %c0_10 = arith.constant 0 : index
    %c0_11 = arith.constant 0 : index
    %28 = vector.load %arg9[%c0_10, %c0_11] : memref<16x96xf32, #tpu.memory_space<vmem>>, vector<16x96xf32>
    %c0_12 = arith.constant 0 : index
    %c0_13 = arith.constant 0 : index
    %29 = vector.load %arg6[%c0_12, %c0_13] : memref<32x96xbf16, #tpu.memory_space<vmem>>, vector<32x96xbf16>
    %cst_14 = arith.constant dense<0.000000e+00> : vector<16x96xf32>
    %30 = tpu.matmul %27, %29, %cst_14 {dimension_numbers = #tpu.dot_dimension_numbers<[1], [0], [0], [1], [0, 0, 1, 1], [], []>} : vector<16x32xbf16>, vector<32x96xbf16>, vector<16x96xf32> -> vector<16x96xf32>
    %31 = arith.addf %28, %30 : vector<16x96xf32>
    %c0_15 = arith.constant 0 : index
    %c0_16 = arith.constant 0 : index
    %32 = vector.load %arg9[%c0_15, %c0_16] : memref<16x96xf32, #tpu.memory_space<vmem>>, vector<16x96xf32>
    tpu.vector_store %arg9[%c0_15, %c0_16], %31 {strides = array<i32>} : memref<16x96xf32, #tpu.memory_space<vmem>>, vector<16x96xf32>,
    %c0_i32_17 = arith.constant 0 : i32
    %33 = arith.cmpi eq, %arg2, %c0_i32_17 : i32
    %34 = arith.extui %33 : i1 to i32
    %c0_i32_18 = arith.constant 0 : i32
    %35 = arith.cmpi ne, %34, %c0_i32_18 : i32
    scf.if %35 {
      %c0_19 = arith.constant 0 : index
      %c0_20 = arith.constant 0 : index
      %36 = vector.load %arg9[%c0_19, %c0_20] : memref<16x96xf32, #tpu.memory_space<vmem>>, vector<16x96xf32>
      %c0_21 = arith.constant 0 : index
      %c0_22 = arith.constant 0 : index
      %37 = vector.load %arg7[%c0_21, %c0_22] : memref<1x96xf32, #tpu.memory_space<vmem>>, vector<1x96xf32>
      %38 = vector.broadcast %37 : vector<1x96xf32> to vector<16x96xf32>
      %39 = arith.addf %36, %38 : vector<16x96xf32>
      %40 = arith.truncf %39 : vector<16x96xf32> to vector<16x96xbf16>
      %c0_23 = arith.constant 0 : index
      %c0_24 = arith.constant 0 : index
      %41 = vector.load %arg8[%c0_23, %c0_24] : memref<16x96xbf16, #tpu.memory_space<vmem>>, vector<16x96xbf16>
      tpu.vector_store %arg8[%c0_23, %c0_24], %40 {strides = array<i32>} : memref<16x96xbf16, #tpu.memory_space<vmem>>, vector<16x96xbf16>,
    } else {
    }
    return
  }
  func.func @transform_0(%arg0: i32, %arg1: i32, %arg2: i32) -> (i32, i32) {
    %c0_i32 = arith.constant 0 : i32
    return %arg0, %arg2 : i32, i32
  }
  func.func @transform_1(%arg0: i32, %arg1: i32, %arg2: i32) -> (i32, i32) {
    %c0_i32 = arith.constant 0 : i32
    %c0_i32_0 = arith.constant 0 : i32
    %c0_i32_1 = arith.constant 0 : i32
    return %c0_i32, %c0_i32_0 : i32, i32
  }
  func.func @transform_2(%arg0: i32, %arg1: i32, %arg2: i32) -> (i32, i32) {
    %c0_i32 = arith.constant 0 : i32
    %c0_i32_0 = arith.constant 0 : i32
    %c0_i32_1 = arith.constant 0 : i32
    return %c0_i32, %c0_i32_0 : i32, i32
  }
  func.func @transform_3(%arg0: i32, %arg1: i32, %arg2: i32) -> (i32, i32) {
    %c0_i32 = arith.constant 0 : i32
    return %arg2, %arg1 : i32, i32
  }
  func.func @transform_4(%arg0: i32, %arg1: i32, %arg2: i32) -> (i32, i32) {
    %c0_i32 = arith.constant 0 : i32
    %c0_i32_0 = arith.constant 0 : i32
    return %c0_i32, %arg1 : i32, i32
  }
  func.func @transform_5(%arg0: i32, %arg1: i32, %arg2: i32) -> (i32, i32) {
    %c0_i32 = arith.constant 0 : i32
    return %arg0, %arg1 : i32, i32
  }
}

</mosaic_0001>

<llo_original>
// kernel: tpu_custom_call.1
$region0: #{tpu_custom_call.1}
  #allocation0 [shape = 'u32[]', space=smem, size = 0x4, offset = 0x4, fixed_abs, tag = 'smem constant byte address 0x4 - core index']
  #allocation1 [shape = 'u32[144,128]{1,0:T(1,128)}', space=vmem, size = 0x12000, scoped, tag = 'internal scratch']
  #allocation2 [shape = 'f32[16,96]{1,0:T(8,128)}', space=vmem, size = 0x2000, scoped, tag = 'scratch operand']
  %s0 = inlined_call_operand.hbm [shape: f32[16,32], index: 0, kind: input, shape index: {}]
  %s1 = inlined_call_operand.vmem [shape: f32[1,32], index: 1, kind: input, shape index: {}]
  %s2 = inlined_call_operand.vmem [shape: f32[1,32], index: 2, kind: input, shape index: {}]
  %s3 = inlined_call_operand.hbm [shape: bf16[32,96], index: 3, kind: input, shape index: {}]
  %s4 = inlined_call_operand.vmem [shape: f32[1,96], index: 4, kind: input, shape index: {}]
  %s5 = inlined_call_operand.hbm [shape: bf16[16,96], index: 5, kind: output, shape index: {}]
  %s6 = sld [smem:[#allocation0]]
  $region46: #{tpu_custom_call.1} parent=0
    _
  %s8 = ssub.s32 1, %s6
  %s9 = scalar_select 0, %s8, %s6
  $region1: #{tpu_custom_call.1} parent=0
    #allocation3 [shape = 'u8[8192]{0}', space=vmem, size = 0x2000, scoped, tag = 'input window, operand 0, single buffered']
    #allocation4 [shape = 's32[1]{0}', space=sflag, size = 0x4, scoped, tag = 'scoped memory for tpu_custom_call.1']
    #allocation5 [shape = 's32[1]{0}', space=sflag, size = 0x4, scoped, tag = 'scoped memory for tpu_custom_call.1']
    #allocation6 [shape = 'u8[8192]{0}', space=vmem, size = 0x2000, scoped, tag = 'input window, operand 3, single buffered']
    #allocation7 [shape = 's32[1]{0}', space=sflag, size = 0x4, scoped, tag = 'scoped memory for tpu_custom_call.1']
    #allocation8 [shape = 'u8[4096]{0}', space=vmem, size = 0x1000, scoped, tag = 'output window, operand 0, single buffered']
    %10 = vsyncpa [#allocation4], 0
    %11 = vsyncpa [#allocation7], 0
    %12 = vsyncpa [#allocation5], 0
    // Predicated region
    $region2: #{tpu_custom_call.1} parent=1 // pred_check
      _
    $region3: #{tpu_custom_call.1} parent=1 // pred_check_branch
      %14 = sbr.rel (0) target = $region5
    $region4: #{tpu_custom_call.1} parent=1 // pred_region
      %s16 = ssub.s32 256, 256
      %17 = vsyncadd [#allocation4], %s16
      %s18 = sshll.u32 [#allocation3], 4
      %s19 = int_to_ptr.vmem [resolvable:$true] %s18
      %24 = dma.hbm_to_vmem [thread:$0]  %s0, 256, %s19, [#allocation4], 128, 128, 8
    $region5: #{tpu_custom_call.1} parent=1 // pred_fallthru
      _
    // Predicated region
    $region6: #{tpu_custom_call.1} parent=1 // pred_check
      _
    $region7: #{tpu_custom_call.1} parent=1 // pred_check_branch
      %26 = sbr.rel (0) target = $region9
    $region8: #{tpu_custom_call.1} parent=1 // pred_region
      _
    $region9: #{tpu_custom_call.1} parent=1 // pred_fallthru
      _
    // Predicated region
    $region10: #{tpu_custom_call.1} parent=1 // pred_check
      _
    $region11: #{tpu_custom_call.1} parent=1 // pred_check_branch
      %28 = sbr.rel (0) target = $region13
    $region12: #{tpu_custom_call.1} parent=1 // pred_region
      _
    $region13: #{tpu_custom_call.1} parent=1 // pred_fallthru
      _
    // Predicated region
    $region14: #{tpu_custom_call.1} parent=1 // pred_check
      _
    $region15: #{tpu_custom_call.1} parent=1 // pred_check_branch
      %30 = sbr.rel (0) target = $region17
    $region16: #{tpu_custom_call.1} parent=1 // pred_region
      %s32 = ssub.s32 256, 256
      %33 = vsyncadd [#allocation7], %s32
      %s34 = sshll.u32 [#allocation6], 4
      %s35 = int_to_ptr.vmem [resolvable:$true] %s34
      %40 = dma.hbm_to_vmem [thread:$0]  %s3, 256, %s35, [#allocation7], 64, 64, 4
    $region17: #{tpu_custom_call.1} parent=1 // pred_fallthru
      _
    // Predicated region
    $region18: #{tpu_custom_call.1} parent=1 // pred_check
      _
    $region19: #{tpu_custom_call.1} parent=1 // pred_check_branch
      %42 = sbr.rel (0) target = $region21
    $region20: #{tpu_custom_call.1} parent=1 // pred_region
      _
    $region21: #{tpu_custom_call.1} parent=1 // pred_fallthru
      _
    // Predicated region
    $region22: #{tpu_custom_call.1} parent=1 // pred_check
      _
    $region23: #{tpu_custom_call.1} parent=1 // pred_check_branch
      %44 = sbr.rel (0) target = $region25
    $region24: #{tpu_custom_call.1} parent=1 // pred_region
      %45 = dma.done [#allocation4], 256
    $region25: #{tpu_custom_call.1} parent=1 // pred_fallthru
      _
    // Predicated region
    $region26: #{tpu_custom_call.1} parent=1 // pred_check
      _
    $region27: #{tpu_custom_call.1} parent=1 // pred_check_branch
      %47 = sbr.rel (0) target = $region29
    $region28: #{tpu_custom_call.1} parent=1 // pred_region
      %48 = dma.done [#allocation7], 256
    $region29: #{tpu_custom_call.1} parent=1 // pred_fallthru
      _
    %p50 = scmp.eq.s32.totalorder 0, 0
    // Predicated region
    $region30: #{tpu_custom_call.1} parent=1 // pred_check
      %p51 = pneg %p50
    $region31: #{tpu_custom_call.1} parent=1 // pred_check_branch
      %53 = sbr.rel (%p51) target = $region33
    $region32: #{tpu_custom_call.1} parent=1 // pred_region
      %vm54 = vcmask 785408
      %55 = vst.msk [vmem:[#allocation2] sm:$0xff] %vm54, 0.0
      %56 = vst.msk [vmem:[#allocation2 + $0x8] sm:$0xff] %vm54, 0.0
    $region33: #{tpu_custom_call.1} parent=1 // pred_fallthru
      _
    %v57 = vld [vmem:[#allocation3] sm:$0xff]
    %v58 = vld [vmem:[#allocation3 + $0x8] sm:$0xff]
    %vm59 = vcmask 261120
    %v60 = vsel %vm59, %v57, 0.0
    %61 = vadd.xlane.f32.xlu0 %v60
    %v62 = vpop.xlane.xlu0 %61
    %v63 = vsel %vm59, %v58, 0.0
    %64 = vadd.xlane.f32.xlu0 %v63
    %v65 = vpop.xlane.xlu0 %64
    %v66 = vrcp.pop 32.0
    %v67 = vmul.f32 %v62, %v66
    %v68 = vmul.f32 %v65, %v66
    %v69 = vsub.f32 %v57, %v67
    %v70 = vsub.f32 %v58, %v68
    %v71 = vmul.f32 %v69, %v69
    %v72 = vmul.f32 %v70, %v70
    %v73 = vsel %vm59, %v71, 0.0
    %74 = vadd.xlane.f32.xlu0 %v73
    %v75 = vpop.xlane.xlu0 %74
    %v76 = vsel %vm59, %v72, 0.0
    %77 = vadd.xlane.f32.xlu0 %v76
    %v78 = vpop.xlane.xlu0 %77
    %v79 = vmul.f32 %v75, 0.032258064
    %v80 = vmul.f32 %v78, 0.032258064
    %v81 = vrsqrt.pop %v79
    %v82 = vmul.f32 %v79, %v81
    %vm83 = vcmp.eq.f32.partialorder %v79, inf
    %v84 = vsel %vm83, %v79, %v82
    %vm85 = vcmp.eq.f32.partialorder %v79, 0.0
    %v86 = vand.u32 %v79, 2147483648
    %v87 = vsel %vm85, %v86, %v84
    %v88 = vrsqrt.pop %v80
    %v89 = vmul.f32 %v80, %v88
    %vm90 = vcmp.eq.f32.partialorder %v80, inf
    %v91 = vsel %vm90, %v80, %v89
    %vm92 = vcmp.eq.f32.partialorder %v80, 0.0
    %v93 = vand.u32 %v80, 2147483648
    %v94 = vsel %vm92, %v93, %v91
    %v95 = vadd.f32 %v87, 1e-06
    %v96 = vadd.f32 %v94, 1e-06
    %v97 = vrcp.pop %v95
    %v98 = vrcp.pop %v96
    %v99 = vmul.f32 %v69, %v97
    %v100 = vmul.f32 %v70, %v98
    %v101 = vld [vmem:[%s1] sm:$0x1]
    %v103 = vlaneseq
    %v104 = vshrl.u32 %v103, 7
    %v105 = vsub.s32 0, %v104
    %v106 = vrot.slane %v101, %v105
    %v108 = vmul.f32 %v99, %v106
    %v109 = vmul.f32 %v100, %v106
    %v110 = vld [vmem:[%s2] sm:$0x1]
    %v112 = vlaneseq
    %v113 = vshrl.u32 %v112, 7
    %v114 = vsub.s32 0, %v113
    %v115 = vrot.slane %v110, %v114
    %v117 = vadd.f32 %v108, %v115
    %v118 = vadd.f32 %v109, %v115
    %v119 = vpack.c.bf16 %v118, %v117
    %v120 = vld [vmem:[#allocation2] sm:$0xff]
    %v121 = vld [vmem:[#allocation2 + $0x8] sm:$0xff]
    %v122 = vld [vmem:[#allocation6] sm:$0xf]
    %v123 = vld [vmem:[#allocation6 + $0x4] sm:$0xf]
    %v124 = vld [vmem:[#allocation6 + $0x8] sm:$0xf]
    %v125 = vld [vmem:[#allocation6 + $0xc] sm:$0xf]
    %v130 = vunpack.c.l.b16 %v122
    %v131 = vunpack.c.l.b16 %v123
    %v132 = vunpack.c.l.b16 %v124
    %v133 = vunpack.c.l.b16 %v125
    %v134 = vpack.c.b16 %v131, %v130
    %v135 = vpack.c.b16 %v133, %v132
    %v139 = vsel %vm59, %v119, 0
    %141 = vmatprep.subr.bf16.mxu0 0
    %142 = vmatpush1.bf16.msra.mxu0 %v134
    %143 = vmatprep.subr.bf16.mxu0 0
    %144 = vmatpush1.bf16.msra.mxu0 %v135
    %145 = vmatprep.subr.bf16.mxu0 0
    %146 = vmatpush1.bf16.msra.mxu0 0
    %147 = vmatprep.subr.bf16.mxu0 0
    %148 = vmatpush1.bf16.msra.mxu0 0
    %149 = vmatprep.subr.bf16.mxu0 0
    %150 = vmatpush1.bf16.msra.mxu0 0
    %151 = vmatprep.subr.bf16.mxu0 0
    %152 = vmatpush1.bf16.msra.mxu0 0
    %153 = vmatprep.subr.bf16.mxu0 0
    %154 = vmatpush1.bf16.msra.mxu0 0
    %155 = vmatprep.subr.bf16.mxu0 0
    %156 = vmatpush1.bf16.msra.mxu0 0
    %157 = vmatprep.subr.bf16.mxu0 0
    %158 = vmatpush1.bf16.msra.mxu0 0
    %159 = vmatprep.subr.bf16.mxu0 0
    %160 = vmatpush1.bf16.msra.mxu0 0
    %161 = vmatprep.subr.bf16.mxu0 0
    %162 = vmatpush1.bf16.msra.mxu0 0
    %163 = vmatprep.subr.bf16.mxu0 0
    %164 = vmatpush1.bf16.msra.mxu0 0
    %165 = vmatprep.subr.bf16.mxu0 0
    %166 = vmatpush1.bf16.msra.mxu0 0
    %167 = vmatprep.subr.bf16.mxu0 0
    %168 = vmatpush1.bf16.msra.mxu0 0
    %169 = vmatprep.subr.bf16.mxu0 0
    %170 = vmatpush1.bf16.msra.mxu0 0
    %171 = vmatprep.subr.bf16.mxu0 0
    %172 = vmatpush1.bf16.msra.mxu0 0
    %173 = vmatprep.mubr.bf16.mxu0 0
    %174 = vmatmul.mubr.bf16.gmra.mrb[0].mxu0 %v139
    %v175 = vpop.f32.mrb[0].mxu0
    %v176 = vadd.f32 0.0, %v175
    %v177 = vpop.f32.mrb[0].mxu0
    %v178 = vpop.f32.mrb[0].mxu0
    %v179 = vadd.f32 0.0, %v178
    %v180 = vpop.f32.mrb[0].mxu0
    %181 = vdwg.mxu0
    %v182 = vadd.f32 %v120, %v176
    %v183 = vadd.f32 %v121, %v179
    %vm184 = vcmask 785408
    %185 = vst.msk [vmem:[#allocation2] sm:$0xff] %vm184, %v182
    %186 = vst.msk [vmem:[#allocation2 + $0x8] sm:$0xff] %vm184, %v183
    // Predicated region
    $region34: #{tpu_custom_call.1} parent=1 // pred_check
      %p187 = pneg %p50
    $region35: #{tpu_custom_call.1} parent=1 // pred_check_branch
      %189 = sbr.rel (%p187) target = $region37
    $region36: #{tpu_custom_call.1} parent=1 // pred_region
      %v190 = vld [vmem:[#allocation2] sm:$0xff]
      %v191 = vld [vmem:[#allocation2 + $0x8] sm:$0xff]
      %v192 = vld [vmem:[%s4] sm:$0x1]
      %v194 = vlaneseq
      %v195 = vshrl.u32 %v194, 7
      %v196 = vsub.s32 0, %v195
      %v197 = vrot.slane %v192, %v196
      %v199 = vadd.f32 %v190, %v197
      %v200 = vadd.f32 %v191, %v197
      %v201 = vpack.c.bf16 %v200, %v199
      %v203 = vunpack.c.l.b16 %v201
      %v204 = vunpack.c.h.b16 %v201
      %v205 = vpack.c.b16 %v203, %v203
      %v206 = vpack.c.b16 %v204, %v204
      %vm209 = vcmask 781312
      %210 = vst.msk [vmem:[#allocation8] sm:$0xf] %vm209, %v205
      %211 = vst.msk [vmem:[#allocation8 + $0x4] sm:$0xf] %vm209, %v206
    $region37: #{tpu_custom_call.1} parent=1 // pred_fallthru
      _
    // Predicated region
    $region38: #{tpu_custom_call.1} parent=1 // pred_check
      _
    $region39: #{tpu_custom_call.1} parent=1 // pred_check_branch
      %213 = sbr.rel (0) target = $region41
    $region40: #{tpu_custom_call.1} parent=1 // pred_region
      %s215 = ssub.s32 128, 128
      %216 = vsyncadd [#allocation5], %s215
      %s217 = sshll.u32 [#allocation8], 4
      %s218 = int_to_ptr.vmem [resolvable:$true] %s217
      %223 = dma.vmem_to_hbm [thread:$0]  %s218, 128, %s5, [#allocation5], 64, 64, 4
    $region41: #{tpu_custom_call.1} parent=1 // pred_fallthru
      _
    // Predicated region
    $region42: #{tpu_custom_call.1} parent=1 // pred_check
      _
    $region43: #{tpu_custom_call.1} parent=1 // pred_check_branch
      %225 = sbr.rel (0) target = $region45
    $region44: #{tpu_custom_call.1} parent=1 // pred_region
      %226 = dma.done [#allocation5], 128
    $region45: #{tpu_custom_call.1} parent=1 // pred_fallthru
      _
    %227 = vsyncpa [#allocation4], 1
    %228 = vsyncpa [#allocation7], 1
    %229 = vsyncpa [#allocation5], 1

</llo_original>
